<compile_context>
chip_gen: v6e
topology: v6e:2x2x1
jax: 0.10.0
libtpu: 0.0.40
codegen_flags: <defaults>
</compile_context>

<pallas_src>
import functools

import jax
import jax.numpy as jnp
from jax.experimental import pallas as pl
from jax.experimental.pallas import tpu as pltpu


def _bn_kernel(x_ref, g_ref, b_ref, o_ref, *, eps):
    # x_ref: (N, TC, HW) ; g_ref/b_ref: (1, TC, 1) ; o_ref: (N, TC, HW)
    x = x_ref[...].astype(jnp.float32)
    n, _, hw = x.shape
    inv_count = 1.0 / (n * hw)

    # Single traversal of the block: accumulate sum and sum-of-squares.
    s1 = jnp.sum(x, axis=(0, 2), keepdims=True)        # (1, TC, 1)
    s2 = jnp.sum(x * x, axis=(0, 2), keepdims=True)    # (1, TC, 1)
    mean = s1 * inv_count
    var = s2 * inv_count - mean * mean                 # biased variance
    var = jnp.maximum(var, 0.0)                        # guard tiny negatives
    inv_std = jax.lax.rsqrt(var + eps)                 # EUP

    # Fold per-channel scalars once: y = x * scale + shift.
    scale = g_ref[...].astype(jnp.float32) * inv_std   # (1, TC, 1)
    shift = b_ref[...].astype(jnp.float32) - mean * scale
    o_ref[...] = (x * scale + shift).astype(o_ref.dtype)


def _choose_tc(N, C, HW, itemsize, cap=None):
    """Largest legal channel tile: divides C, is C or a multiple of 8, fits budget."""
    budget = 16 * 1024 * 1024                     # conservative (v5e scoped default)
    # in + out tiles, double-buffered, plus an f32 working copy inside the body.
    per_ch = N * HW * (4 * itemsize + 4)
    max_tc = max(1, budget // per_ch)
    if cap is not None:
        max_tc = min(max_tc, cap)

    best = None
    for t in range(1, C + 1):
        if C % t:
            continue
        if t != C and t % 8:                      # (8,128) sublane legality
            continue
        if t <= max_tc:
            best = t
    if best is None:                              # fall back to smallest legal tile
        for t in range(1, C + 1):
            if C % t == 0 and (t == C or t % 8 == 0):
                best = t
                break
    return best


def batchnorm2d_pallas(x, gamma, beta, eps=1e-5, max_channels_per_tile=None):
    """Training-mode BatchNorm2d forward. x: (N, C, H, W)."""
    N, C, H, W = x.shape
    HW = H * W

    # Free views of the NCHW layout -- no HBM round-trip in the wrapper.
    x3 = x.reshape(N, C, HW)
    g3 = gamma.reshape(1, C, 1)
    b3 = beta.reshape(1, C, 1)

    tc = _choose_tc(N, C, HW, x.dtype.itemsize, cap=max_channels_per_tile)
    grid = (C // tc,)

    tile_bytes = N * tc * HW * x.dtype.itemsize
    # Enough headroom for double-buffered in/out tiles + f32 temporaries,
    # capped at 64 MiB so the limit is legal on v7x as well as v5e/v6e.
    vmem_limit = int(min(64 * 1024 * 1024,
                         max(32 * 1024 * 1024, 6 * tile_bytes)))

    kernel = functools.partial(_bn_kernel, eps=eps)
    out3 = pl.pallas_call(
        kernel,
        out_shape=jax.ShapeDtypeStruct((N, C, HW), x.dtype),
        grid=grid,
        in_specs=[
            pl.BlockSpec((N, tc, HW), lambda c: (0, c, 0)),
            pl.BlockSpec((1, tc, 1), lambda c: (0, c, 0)),
            pl.BlockSpec((1, tc, 1), lambda c: (0, c, 0)),
        ],
        out_specs=pl.BlockSpec((N, tc, HW), lambda c: (0, c, 0)),
        compiler_params=pltpu.CompilerParams(
            dimension_semantics=("parallel",),
            vmem_limit_bytes=vmem_limit,
        ),
    )(x3, g3, b3)

    return out3.reshape(N, C, H, W)


def _reference_bn(x, gamma, beta, eps=1e-5):
    xf = x.astype(jnp.float32)
    mean = jnp.mean(xf, axis=(0, 2, 3), keepdims=True)
    var = jnp.mean((xf - mean) ** 2, axis=(0, 2, 3), keepdims=True)
    g = gamma.reshape(1, -1, 1, 1)
    b = beta.reshape(1, -1, 1, 1)
    return ((xf - mean) * jax.lax.rsqrt(var + eps) * g + b).astype(x.dtype)


if __name__ == "__main__":
    key = jax.random.PRNGKey(0)
    k1, k2 = jax.random.split(key)

    # Test 1: module-consistent small shape (single channel tile, TC == C).
    N, C, H, W = 2, 4, 16, 16
    x = jax.random.normal(k1, (N, C, H, W), dtype=jnp.float32)
    gamma = jnp.ones((C,), dtype=jnp.float32)   # nn.BatchNorm2d weight init
    beta = jnp.zeros((C,), dtype=jnp.float32)   # nn.BatchNorm2d bias init

    out = jax.block_until_ready(batchnorm2d_pallas(x, gamma, beta))
    ref = _reference_bn(x, gamma, beta)
    assert jnp.allclose(out, ref, atol=1e-4, rtol=1e-4)

    # Test 2: exercise the channel-tiled grid path (TC=8 -> grid=(2,)).
    N2, C2, H2, W2 = 2, 16, 16, 16
    x2 = jax.random.normal(k2, (N2, C2, H2, W2), dtype=jnp.float32)
    gamma2 = jnp.ones((C2,), dtype=jnp.float32)
    beta2 = jnp.zeros((C2,), dtype=jnp.float32)

    out2 = jax.block_until_ready(
        batchnorm2d_pallas(x2, gamma2, beta2, max_channels_per_tile=8)
    )
    ref2 = _reference_bn(x2, gamma2, beta2)
    assert jnp.allclose(out2, ref2, atol=1e-4, rtol=1e-4)

    print("KERNEL_OK")
</pallas_src>

<mosaic_0001>
module attributes {stable_mosaic.version = 11 : i64} {
  func.func @_bn_kernel(%arg0: i32, %arg1: memref<2x4x256xf32, #tpu.memory_space<vmem>>, %arg2: memref<1x4x1xf32, #tpu.memory_space<vmem>>, %arg3: memref<1x4x1xf32, #tpu.memory_space<vmem>>, %arg4: memref<2x4x256xf32, #tpu.memory_space<vmem>>) attributes {dimension_semantics = [#tpu.dimension_semantics<parallel>], iteration_bounds = array<i64: 1>, scalar_prefetch = 0 : i64, scratch_operands = 0 : i64, tpu.core_type = #tpu.core_type<tc>, window_params = [{transform_indices = @transform_0, window_bounds = array<i64: 2, 4, 256>}, {transform_indices = @transform_1, window_bounds = array<i64: 1, 4, 1>}, {transform_indices = @transform_2, window_bounds = array<i64: 1, 4, 1>}, {transform_indices = @transform_3, window_bounds = array<i64: 2, 4, 256>}]} {
    %c0 = arith.constant 0 : index
    %c0_0 = arith.constant 0 : index
    %c0_1 = arith.constant 0 : index
    %0 = vector.load %arg1[%c0, %c0_0, %c0_1] : memref<2x4x256xf32, #tpu.memory_space<vmem>>, vector<2x4x256xf32>
    %cst = arith.constant dense<0.000000e+00> : vector<4xf32>
    %1 = vector.multi_reduction <add>, %0, %cst [0, 2] : vector<2x4x256xf32> to vector<4xf32>
    %2 = vector.shape_cast %1 : vector<4xf32> to vector<1x4x1xf32>
    %3 = arith.mulf %0, %0 : vector<2x4x256xf32>
    %cst_2 = arith.constant dense<0.000000e+00> : vector<4xf32>
    %4 = vector.multi_reduction <add>, %3, %cst_2 [0, 2] : vector<2x4x256xf32> to vector<4xf32>
    %5 = vector.shape_cast %4 : vector<4xf32> to vector<1x4x1xf32>
    %cst_3 = arith.constant 0.001953125 : f32
    %6 = vector.broadcast %cst_3 : f32 to vector<1x4x1xf32>
    %7 = arith.mulf %2, %6 : vector<1x4x1xf32>
    %cst_4 = arith.constant 0.001953125 : f32
    %8 = vector.broadcast %cst_4 : f32 to vector<1x4x1xf32>
    %9 = arith.mulf %5, %8 : vector<1x4x1xf32>
    %10 = arith.mulf %7, %7 : vector<1x4x1xf32>
    %11 = arith.subf %9, %10 : vector<1x4x1xf32>
    %cst_5 = arith.constant 0.000000e+00 : f32
    %12 = vector.broadcast %cst_5 : f32 to vector<1x4x1xf32>
    %13 = arith.maximumf %11, %12 : vector<1x4x1xf32>
    %cst_6 = arith.constant 9.99999974E-6 : f32
    %14 = vector.broadcast %cst_6 : f32 to vector<1x4x1xf32>
    %15 = arith.addf %13, %14 : vector<1x4x1xf32>
    %16 = math.rsqrt %15 : vector<1x4x1xf32>
    %c0_7 = arith.constant 0 : index
    %c0_8 = arith.constant 0 : index
    %c0_9 = arith.constant 0 : index
    %17 = vector.load %arg2[%c0_7, %c0_8, %c0_9] : memref<1x4x1xf32, #tpu.memory_space<vmem>>, vector<1x4x1xf32>
    %18 = arith.mulf %17, %16 : vector<1x4x1xf32>
    %c0_10 = arith.constant 0 : index
    %c0_11 = arith.constant 0 : index
    %c0_12 = arith.constant 0 : index
    %19 = vector.load %arg3[%c0_10, %c0_11, %c0_12] : memref<1x4x1xf32, #tpu.memory_space<vmem>>, vector<1x4x1xf32>
    %20 = arith.mulf %7, %18 : vector<1x4x1xf32>
    %21 = arith.subf %19, %20 : vector<1x4x1xf32>
    %22 = vector.broadcast %18 : vector<1x4x1xf32> to vector<2x4x256xf32>
    %23 = arith.mulf %0, %22 : vector<2x4x256xf32>
    %24 = vector.broadcast %21 : vector<1x4x1xf32> to vector<2x4x256xf32>
    %25 = arith.addf %23, %24 : vector<2x4x256xf32>
    %c0_13 = arith.constant 0 : index
    %c0_14 = arith.constant 0 : index
    %c0_15 = arith.constant 0 : index
    %26 = vector.load %arg4[%c0_13, %c0_14, %c0_15] : memref<2x4x256xf32, #tpu.memory_space<vmem>>, vector<2x4x256xf32>
    tpu.vector_store %arg4[%c0_13, %c0_14, %c0_15], %25 {strides = array<i32>} : memref<2x4x256xf32, #tpu.memory_space<vmem>>, vector<2x4x256xf32>,
    return
  }
  func.func @transform_0(%arg0: i32) -> (i32, i32, i32) {
    %c0_i32 = arith.constant 0 : i32
    %c0_i32_0 = arith.constant 0 : i32
    %c0_i32_1 = arith.constant 0 : i32
    return %c0_i32, %arg0, %c0_i32_0 : i32, i32, i32
  }
  func.func @transform_1(%arg0: i32) -> (i32, i32, i32) {
    %c0_i32 = arith.constant 0 : i32
    %c0_i32_0 = arith.constant 0 : i32
    %c0_i32_1 = arith.constant 0 : i32
    return %c0_i32, %arg0, %c0_i32_0 : i32, i32, i32
  }
  func.func @transform_2(%arg0: i32) -> (i32, i32, i32) {
    %c0_i32 = arith.constant 0 : i32
    %c0_i32_0 = arith.constant 0 : i32
    %c0_i32_1 = arith.constant 0 : i32
    return %c0_i32, %arg0, %c0_i32_0 : i32, i32, i32
  }
  func.func @transform_3(%arg0: i32) -> (i32, i32, i32) {
    %c0_i32 = arith.constant 0 : i32
    %c0_i32_0 = arith.constant 0 : i32
    %c0_i32_1 = arith.constant 0 : i32
    return %c0_i32, %arg0, %c0_i32_0 : i32, i32, i32
  }
}

</mosaic_0001>

<llo_original>
// kernel: tpu_custom_call.1
$region0: #{tpu_custom_call.1}
  #allocation0 [shape = 'u32[]', space=smem, size = 0x4, offset = 0x4, fixed_abs, tag = 'smem constant byte address 0x4 - core index']
  #allocation1 [shape = 'u32[144,128]{1,0:T(1,128)}', space=vmem, size = 0x12000, scoped, tag = 'internal scratch']
  %s0 = inlined_call_operand.hbm [shape: f32[2,4,256], index: 0, kind: input, shape index: {}]
  %s1 = inlined_call_operand.vmem [shape: f32[1,4,1], index: 1, kind: input, shape index: {}]
  %s2 = inlined_call_operand.vmem [shape: f32[1,4,1], index: 2, kind: input, shape index: {}]
  %s3 = inlined_call_operand.hbm [shape: f32[2,4,256], index: 3, kind: output, shape index: {}]
  %s4 = sld [smem:[#allocation0]]
  $region26: #{tpu_custom_call.1} parent=0
    _
  %s6 = ssub.s32 1, %s4
  %s7 = scalar_select 0, %s6, %s4
  $region1: #{tpu_custom_call.1} parent=0
    #allocation2 [shape = 'u8[8192]{0}', space=vmem, size = 0x2000, scoped, tag = 'input window, operand 0, single buffered']
    #allocation3 [shape = 's32[1]{0}', space=sflag, size = 0x4, scoped, tag = 'scoped memory for tpu_custom_call.1']
    #allocation4 [shape = 's32[1]{0}', space=sflag, size = 0x4, scoped, tag = 'scoped memory for tpu_custom_call.1']
    #allocation5 [shape = 'u8[8192]{0}', space=vmem, size = 0x2000, scoped, tag = 'output window, operand 0, single buffered']
    %8 = vsyncpa [#allocation3], 0
    %9 = vsyncpa [#allocation4], 0
    // Predicated region
    $region2: #{tpu_custom_call.1} parent=1 // pred_check
      _
    $region3: #{tpu_custom_call.1} parent=1 // pred_check_branch
      %11 = sbr.rel (0) target = $region5
    $region4: #{tpu_custom_call.1} parent=1 // pred_region
      %s13 = ssub.s32 256, 256
      %14 = vsyncadd [#allocation3], %s13
      %s15 = sshll.u32 [#allocation2], 4
      %s16 = int_to_ptr.vmem [resolvable:$true] %s15
      %21 = dma.hbm_to_vmem [thread:$0]  %s0, 256, %s16, [#allocation3], 128, 128, 8
    $region5: #{tpu_custom_call.1} parent=1 // pred_fallthru
      _
    // Predicated region
    $region6: #{tpu_custom_call.1} parent=1 // pred_check
      _
    $region7: #{tpu_custom_call.1} parent=1 // pred_check_branch
      %23 = sbr.rel (0) target = $region9
    $region8: #{tpu_custom_call.1} parent=1 // pred_region
      _
    $region9: #{tpu_custom_call.1} parent=1 // pred_fallthru
      _
    // Predicated region
    $region10: #{tpu_custom_call.1} parent=1 // pred_check
      _
    $region11: #{tpu_custom_call.1} parent=1 // pred_check_branch
      %25 = sbr.rel (0) target = $region13
    $region12: #{tpu_custom_call.1} parent=1 // pred_region
      _
    $region13: #{tpu_custom_call.1} parent=1 // pred_fallthru
      _
    // Predicated region
    $region14: #{tpu_custom_call.1} parent=1 // pred_check
      _
    $region15: #{tpu_custom_call.1} parent=1 // pred_check_branch
      %27 = sbr.rel (0) target = $region17
    $region16: #{tpu_custom_call.1} parent=1 // pred_region
      %28 = dma.done [#allocation3], 256
    $region17: #{tpu_custom_call.1} parent=1 // pred_fallthru
      _
    %v29 = vld [vmem:[#allocation2] sm:$0xff]
    %v30 = vld [vmem:[#allocation2 + $0x8] sm:$0xff]
    %v33 = vcombine.high %v29, %v29
    %v34 = vcombine.high %v30, %v30
    %vm37 = vcmask 1043456
    %v38 = vsel %vm37, %v29, 0.0
    %v39 = vsel %vm37, %v33, 0.0
    %v40 = vadd.f32 %v38, %v39
    %v41 = vsel %vm37, %v30, 0.0
    %v42 = vadd.f32 %v40, %v41
    %v43 = vsel %vm37, %v34, 0.0
    %v44 = vadd.f32 %v42, %v43
    %45 = vadd.xlane.f32.xlu0 %v44
    %v46 = vpop.xlane.xlu0 %45
    %v47 = vmul.f32 %v29, %v29
    %v48 = vmul.f32 %v30, %v30
    %v51 = vcombine.high %v47, %v47
    %v52 = vcombine.high %v48, %v48
    %v55 = vsel %vm37, %v47, 0.0
    %v56 = vsel %vm37, %v51, 0.0
    %v57 = vadd.f32 %v55, %v56
    %v58 = vsel %vm37, %v48, 0.0
    %v59 = vadd.f32 %v57, %v58
    %v60 = vsel %vm37, %v52, 0.0
    %v61 = vadd.f32 %v59, %v60
    %62 = vadd.xlane.f32.xlu0 %v61
    %v63 = vpop.xlane.xlu0 %62
    %v64 = vmul.f32 %v46, 0.001953125
    %v65 = vmul.f32 %v63, 0.001953125
    %v66 = vmul.f32 %v64, %v64
    %v67 = vsub.f32 %v65, %v66
    %v68 = vmax.f32 %v67, 0.0
    %v69 = vadd.f32 %v68, 1e-05
    %v70 = vrsqrt.pop %v69
    %v71 = vld [vmem:[%s1] sm:$0xf]
    %v72 = vmul.f32 %v71, %v70
    %v73 = vld [vmem:[%s2] sm:$0xf]
    %v74 = vmul.f32 %v64, %v72
    %v75 = vsub.f32 %v73, %v74
    %77 = vset.pattern.permute.xlu0 0
    %78 = vperm.xlu0 %77, %v72
    %v79 = vpop.permute.xlu0 %78
    %v81 = vunpack.c.l.s4 839922192
    %v82 = vunpack.c.0.s8 %v81
    %v83 = vlaneseq
    %v84 = vshrl.u32 %v83, 7
    %v85 = vsub.s32 %v82, %v84
    %v86 = vrot.slane %v79, %v85
    %v88 = vmul.f32 %v29, %v86
    %v89 = vmul.f32 %v30, %v86
    %91 = vset.pattern.permute.xlu0 0
    %92 = vperm.xlu0 %91, %v75
    %v93 = vpop.permute.xlu0 %92
    %v95 = vunpack.c.l.s4 839922192
    %v96 = vunpack.c.0.s8 %v95
    %v97 = vlaneseq
    %v98 = vshrl.u32 %v97, 7
    %v99 = vsub.s32 %v96, %v98
    %v100 = vrot.slane %v93, %v99
    %v102 = vadd.f32 %v88, %v100
    %v103 = vadd.f32 %v89, %v100
    %104 = vst [vmem:[#allocation5] sm:$0xff] %v102
    %105 = vst [vmem:[#allocation5 + $0x8] sm:$0xff] %v103
    // Predicated region
    $region18: #{tpu_custom_call.1} parent=1 // pred_check
      _
    $region19: #{tpu_custom_call.1} parent=1 // pred_check_branch
      %107 = sbr.rel (0) target = $region21
    $region20: #{tpu_custom_call.1} parent=1 // pred_region
      %s109 = ssub.s32 256, 256
      %110 = vsyncadd [#allocation4], %s109
      %s111 = sshll.u32 [#allocation5], 4
      %s112 = int_to_ptr.vmem [resolvable:$true] %s111
      %117 = dma.vmem_to_hbm [thread:$0]  %s112, 256, %s3, [#allocation4], 128, 128, 8
    $region21: #{tpu_custom_call.1} parent=1 // pred_fallthru
      _
    // Predicated region
    $region22: #{tpu_custom_call.1} parent=1 // pred_check
      _
    $region23: #{tpu_custom_call.1} parent=1 // pred_check_branch
      %119 = sbr.rel (0) target = $region25
    $region24: #{tpu_custom_call.1} parent=1 // pred_region
      %120 = dma.done [#allocation4], 256
    $region25: #{tpu_custom_call.1} parent=1 // pred_fallthru
      _
    %121 = vsyncpa [#allocation3], 1
    %122 = vsyncpa [#allocation4], 1

</llo_original>
